<compile_context>
chip_gen: v6e
topology: v6e:2x2x1
jax: 0.10.0
libtpu: 0.0.40
codegen_flags: <defaults>
</compile_context>

<pallas_src>
import jax
import jax.numpy as jnp
from jax.experimental import pallas as pl
from jax.experimental.pallas import tpu as pltpu

DIM = 16
HEADS = 4
MLP_RATIO = 4
HID = DIM * MLP_RATIO
QKV = 3 * HEADS * DIM
LN_EPS = 1e-5                      # torch.nn.LayerNorm default
VMEM_LIMIT_BYTES = 48 * 1024 * 1024  # fits v7x (64 MiB/TC); ample headroom on v5e/v6e


def _round_up(x, m):
    return (x + m - 1) // m * m


def _choose_tile(m_tokens, tile_m):
    tile_m = max(128, _round_up(tile_m, 128))          # lane-dense, (8,128)-legal
    return min(tile_m, _round_up(m_tokens, 128))


def _layernorm_fm(x, g, b):
    # x: (D, T) feature-major; normalize over the feature (sublane) axis.
    # Single-pass stats: both XLU reductions are independent (no serial mu -> var chain).
    s1 = jnp.sum(x, axis=0, keepdims=True)
    s2 = jnp.sum(x * x, axis=0, keepdims=True)
    mu = s1 * (1.0 / DIM)
    var = s2 * (1.0 / DIM) - mu * mu
    return (x - mu) * jax.lax.rsqrt(var + LN_EPS) * g + b


def transformer_encoder_kernel(
    x_ref,
    ln1_g_ref, ln1_b_ref,
    wqkv_ref, bqkv_ref,
    wo_ref, bo_ref,
    ln2_g_ref, ln2_b_ref,
    w1_ref, b1_ref,
    w2_ref, b2_ref,
    out_ref,
):
    x = x_ref[...]                                                # (D, T) f32

    # ---------------- LayerNorm 1 ----------------
    x1 = _layernorm_fm(x, ln1_g_ref[...], ln1_b_ref[...])

    # ---------------- fused q/k/v projection (bf16 MXU, f32 accumulation) ----------------
    qkv = jnp.dot(wqkv_ref[...], x1.astype(jnp.bfloat16),
                  preferred_element_type=jnp.float32)             # (3*H*D, T), raw (no bias)
    bqkv = bqkv_ref[...]                                          # (3*H*D, 1) f32
    HD = HEADS * DIM

    # Per-head q*k with the bias folded into the consuming op; the 1/sqrt(dim)
    # attention scale is already folded into Wq/bq in pack_params.
    d = []
    for h in range(HEADS):                                        # static unroll, H = 4
        lo = h * DIM
        qh = qkv[lo:lo + DIM] + bqkv[lo:lo + DIM]
        kh = qkv[HD + lo:HD + lo + DIM] + bqkv[HD + lo:HD + lo + DIM]
        d.append(qh * kh)
    m = jnp.maximum(jnp.maximum(d[0], d[1]), jnp.maximum(d[2], d[3]))

    # ---------------- softmax over heads + weighted mean over heads ----------------
    num = jnp.zeros_like(m)
    den = jnp.zeros_like(m)
    for h in range(HEADS):
        lo = h * DIM
        e = jnp.exp(d[h] - m)
        den = den + e
        num = num + e * (qkv[2 * HD + lo:2 * HD + lo + DIM]
                         + bqkv[2 * HD + lo:2 * HD + lo + DIM])
    attn = num * pl.reciprocal(den, approx=True)                  # (D, T); 1/H folded into Wo

    attn_out = (jnp.dot(wo_ref[...], attn.astype(jnp.bfloat16),
                        preferred_element_type=jnp.float32) + bo_ref[...])
    x = x + attn_out

    # ---------------- LayerNorm 2 + MLP ----------------
    x2 = _layernorm_fm(x, ln2_g_ref[...], ln2_b_ref[...])
    h1 = (jnp.dot(w1_ref[...], x2.astype(jnp.bfloat16),
                  preferred_element_type=jnp.float32) + b1_ref[...])
    # exact (erf) GELU, matching torch.nn.GELU() default
    h1 = 0.5 * h1 * (1.0 + jax.lax.erf(h1 * (2.0 ** -0.5)))
    h2 = (jnp.dot(w2_ref[...], h1.astype(jnp.bfloat16),
                  preferred_element_type=jnp.float32) + b2_ref[...])

    out_ref[...] = (x + h2).astype(out_ref.dtype)


def pack_params(p):
    """Repack x@W+b convention params into feature-major kernel params.

    Folds the 1/sqrt(dim) attention scale into Wq/bq and the 1/heads mean into Wo,
    and pre-casts matmul weights to bf16 (biases / LN params stay f32).
    """
    H, D = HEADS, DIM
    scale = 1.0 / (D ** 0.5)

    # PyTorch reshape (b,n,dim,heads): output column d*H + h belongs to (feature d, head h).
    def head_block_w(w):        # (D, D*H) -> (H*D, D); head h occupies rows h*D:(h+1)*D
        return jnp.concatenate([w[:, h::H].T for h in range(H)], axis=0)

    def head_block_b(b):        # (D*H,) -> (H*D, 1)
        return jnp.concatenate([b[h::H] for h in range(H)], axis=0)[:, None]

    wqkv = jnp.concatenate([head_block_w(p["wq"]) * scale,        # fold attention scale
                            head_block_w(p["wk"]),
                            head_block_w(p["wv"])], axis=0)       # (192, 16)
    bqkv = jnp.concatenate([head_block_b(p["bq"]) * scale,
                            head_block_b(p["bk"]),
                            head_block_b(p["bv"])], axis=0)       # (192, 1)
    return dict(
        ln1_g=p["ln1_g"][:, None].astype(jnp.float32),
        ln1_b=p["ln1_b"][:, None].astype(jnp.float32),
        wqkv=wqkv.astype(jnp.bfloat16),
        bqkv=bqkv.astype(jnp.float32),
        wo=(p["wo"].T * (1.0 / H)).astype(jnp.bfloat16),          # fold mean over heads
        bo=p["bo"][:, None].astype(jnp.float32),
        ln2_g=p["ln2_g"][:, None].astype(jnp.float32),
        ln2_b=p["ln2_b"][:, None].astype(jnp.float32),
        w1=p["w1"].T.astype(jnp.bfloat16),
        b1=p["b1"][:, None].astype(jnp.float32),
        w2=p["w2"].T.astype(jnp.bfloat16),
        b2=p["b2"][:, None].astype(jnp.float32),
    )


def transformer_encoder_fm(x_fm, kp, *, tile_m=8192):
    """One encoder layer on feature-major activations (DIM, M), M % 128 == 0.

    Stacked layers should call this repeatedly so the (B,N,D) <-> feature-major layout
    change (and its HBM round trips) is paid only once at model entry/exit.
    On v7x prefer tile_m <= 8192 so the grid keeps >= 2 steps for both TensorCores.
    """
    D, M = x_fm.shape
    assert D == DIM and M % 128 == 0
    tile_m = _choose_tile(M, tile_m)
    assert M % tile_m == 0, "feature-major token count must be a multiple of tile_m"

    params = [kp["ln1_g"], kp["ln1_b"], kp["wqkv"], kp["bqkv"],
              kp["wo"], kp["bo"], kp["ln2_g"], kp["ln2_b"],
              kp["w1"], kp["b1"], kp["w2"], kp["b2"]]

    grid = (M // tile_m,)
    tok_spec = pl.BlockSpec((DIM, tile_m), lambda i: (0, i))
    # Parameters: full-array blocks with constant index map -> fetched once, VMEM-resident.
    param_specs = [pl.BlockSpec(w.shape, lambda i: (0, 0)) for w in params]

    flops = 2 * M * DIM * (QKV + DIM + HID) + 2 * M * HID * DIM
    transcendentals = M * (HEADS * DIM + HID + DIM + 2)           # exp + erf + recip + rsqrt
    bytes_accessed = (2 * M * DIM * 4
                      + sum(int(w.size) * w.dtype.itemsize for w in params))

    return pl.pallas_call(
        transformer_encoder_kernel,
        out_shape=jax.ShapeDtypeStruct((DIM, M), jnp.float32),
        grid=grid,
        in_specs=[tok_spec] + param_specs,
        out_specs=tok_spec,
        compiler_params=pltpu.CompilerParams(
            dimension_semantics=("parallel",),
            vmem_limit_bytes=VMEM_LIMIT_BYTES),
        cost_estimate=pl.CostEstimate(
            flops=int(flops),
            transcendentals=int(transcendentals),
            bytes_accessed=int(bytes_accessed)),
    )(x_fm, *params)


def transformer_encoder_stack(x, layer_params, *, tile_m=8192):
    """Apply a stack of encoder layers to token-major x: (B, N, D) float32.

    The feature-major transpose + pad happens exactly once at entry and once at exit,
    regardless of depth; padded tokens are per-token garbage that never mixes with
    valid tokens and is sliced away at the end.
    """
    B, N, D = x.shape
    assert D == DIM
    M = B * N
    tile_m = _choose_tile(M, tile_m)
    m_pad = _round_up(M, tile_m)

    x_fm = x.reshape(M, D).T                                      # (D, M) feature-major
    if m_pad != M:
        x_fm = jnp.pad(x_fm, ((0, 0), (0, m_pad - M)))
    for p in layer_params:
        x_fm = transformer_encoder_fm(x_fm, pack_params(p), tile_m=tile_m)
    return x_fm[:, :M].T.reshape(B, N, D)


def transformer_encoder(x, p, *, tile_m=8192):
    """Single TransformerEncoder layer; x: (B, N, D), p: dict in the x @ W + b convention."""
    return transformer_encoder_stack(x, [p], tile_m=tile_m)


def reference(x, p):
    """Plain-JAX replica of the PyTorch forward (for the sanity check)."""
    def ln(z, g, b):
        mu = z.mean(-1, keepdims=True)
        var = ((z - mu) ** 2).mean(-1, keepdims=True)
        return (z - mu) / jnp.sqrt(var + LN_EPS) * g + b

    b_, n_, c = x.shape
    x1 = ln(x, p["ln1_g"], p["ln1_b"])
    q = (x1 @ p["wq"] + p["bq"]).reshape(b_, n_, DIM, HEADS)
    k = (x1 @ p["wk"] + p["bk"]).reshape(b_, n_, DIM, HEADS)
    v = (x1 @ p["wv"] + p["bv"]).reshape(b_, n_, DIM, HEADS)
    dot = q * k * (1.0 / DIM ** 0.5)
    attn = jax.nn.softmax(dot, axis=-1)
    a = (attn * v).mean(axis=3).reshape(b_, n_, c)
    a = a @ p["wo"] + p["bo"]
    x = x + a
    x2 = ln(x, p["ln2_g"], p["ln2_b"])
    h = x2 @ p["w1"] + p["b1"]
    h = 0.5 * h * (1.0 + jax.lax.erf(h / jnp.sqrt(2.0)))
    return x + h @ p["w2"] + p["b2"]


if __name__ == "__main__":
    D, H = DIM, HEADS
    key = jax.random.PRNGKey(0)
    ks = jax.random.split(key, 18)

    params = {
        "ln1_g": 1.0 + 0.1 * jax.random.normal(ks[1], (D,), jnp.float32),
        "ln1_b": 0.1 * jax.random.normal(ks[2], (D,), jnp.float32),
        "wq": 0.1 * jax.random.normal(ks[3], (D, D * H), jnp.float32),
        "bq": 0.1 * jax.random.normal(ks[4], (D * H,), jnp.float32),
        "wk": 0.1 * jax.random.normal(ks[5], (D, D * H), jnp.float32),
        "bk": 0.1 * jax.random.normal(ks[6], (D * H,), jnp.float32),
        "wv": 0.1 * jax.random.normal(ks[7], (D, D * H), jnp.float32),
        "bv": 0.1 * jax.random.normal(ks[8], (D * H,), jnp.float32),
        "wo": 0.1 * jax.random.normal(ks[9], (D, D), jnp.float32),
        "bo": 0.1 * jax.random.normal(ks[10], (D,), jnp.float32),
        "ln2_g": 1.0 + 0.1 * jax.random.normal(ks[11], (D,), jnp.float32),
        "ln2_b": 0.1 * jax.random.normal(ks[12], (D,), jnp.float32),
        "w1": 0.1 * jax.random.normal(ks[13], (D, D * MLP_RATIO), jnp.float32),
        "b1": 0.1 * jax.random.normal(ks[14], (D * MLP_RATIO,), jnp.float32),
        "w2": 0.1 * jax.random.normal(ks[15], (D * MLP_RATIO, D), jnp.float32),
        "b2": jnp.zeros((D,), jnp.float32),
    }

    def check(B, N, xkey, tile_m, depth=1, tol=2e-2, mean_tol=2e-3):
        x = jax.random.normal(xkey, (B, N, D), dtype=jnp.float32)
        out = jax.block_until_ready(
            transformer_encoder_stack(x, [params] * depth, tile_m=tile_m))
        ref = x
        for _ in range(depth):
            ref = reference(ref, params)
        assert out.shape == (B, N, D)
        err = float(jnp.max(jnp.abs(out - ref)))
        merr = float(jnp.mean(jnp.abs(out - ref)))
        # tolerances cover bf16 MXU operands (f32 accumulation) + EUP approx reciprocal
        assert err < tol and merr < mean_tol, (
            f"mismatch vs reference: max abs err {err}, mean abs err {merr}")

    # small shape from the module spec (tile clamps to a single 128-token block)
    check(2, 8, ks[0], tile_m=8192)
    # larger, uneven token count; exercises the multi-tile parallel grid + edge padding
    check(3, 345, ks[16], tile_m=256)
    # stacked layers via the feature-major API: layout change paid once at entry/exit
    check(2, 256, ks[17], tile_m=256, depth=3, tol=5e-2, mean_tol=5e-3)

    print("KERNEL_OK")
</pallas_src>

<mosaic_0001>
module attributes {stable_mosaic.version = 11 : i64} {
  func.func @transformer_encoder_kernel(%arg0: i32, %arg1: memref<16x128xf32, #tpu.memory_space<vmem>>, %arg2: memref<16x1xf32, #tpu.memory_space<vmem>>, %arg3: memref<16x1xf32, #tpu.memory_space<vmem>>, %arg4: memref<192x16xbf16, #tpu.memory_space<vmem>>, %arg5: memref<192x1xf32, #tpu.memory_space<vmem>>, %arg6: memref<16x16xbf16, #tpu.memory_space<vmem>>, %arg7: memref<16x1xf32, #tpu.memory_space<vmem>>, %arg8: memref<16x1xf32, #tpu.memory_space<vmem>>, %arg9: memref<16x1xf32, #tpu.memory_space<vmem>>, %arg10: memref<64x16xbf16, #tpu.memory_space<vmem>>, %arg11: memref<64x1xf32, #tpu.memory_space<vmem>>, %arg12: memref<16x64xbf16, #tpu.memory_space<vmem>>, %arg13: memref<16x1xf32, #tpu.memory_space<vmem>>, %arg14: memref<16x128xf32, #tpu.memory_space<vmem>>) attributes {dimension_semantics = [#tpu.dimension_semantics<parallel>], iteration_bounds = array<i64: 1>, scalar_prefetch = 0 : i64, scratch_operands = 0 : i64, tpu.core_type = #tpu.core_type<tc>, window_params = [{transform_indices = @transform_0, window_bounds = array<i64: 16, 128>}, {pipeline_mode = #tpu.pipeline_mode<synchronous>, transform_indices = @transform_1, window_bounds = array<i64: 16, 1>}, {pipeline_mode = #tpu.pipeline_mode<synchronous>, transform_indices = @transform_2, window_bounds = array<i64: 16, 1>}, {pipeline_mode = #tpu.pipeline_mode<synchronous>, transform_indices = @transform_3, window_bounds = array<i64: 192, 16>}, {pipeline_mode = #tpu.pipeline_mode<synchronous>, transform_indices = @transform_4, window_bounds = array<i64: 192, 1>}, {pipeline_mode = #tpu.pipeline_mode<synchronous>, transform_indices = @transform_5, window_bounds = array<i64: 16, 16>}, {pipeline_mode = #tpu.pipeline_mode<synchronous>, transform_indices = @transform_6, window_bounds = array<i64: 16, 1>}, {pipeline_mode = #tpu.pipeline_mode<synchronous>, transform_indices = @transform_7, window_bounds = array<i64: 16, 1>}, {pipeline_mode = #tpu.pipeline_mode<synchronous>, transform_indices = @transform_8, window_bounds = array<i64: 16, 1>}, {pipeline_mode = #tpu.pipeline_mode<synchronous>, transform_indices = @transform_9, window_bounds = array<i64: 64, 16>}, {pipeline_mode = #tpu.pipeline_mode<synchronous>, transform_indices = @transform_10, window_bounds = array<i64: 64, 1>}, {pipeline_mode = #tpu.pipeline_mode<synchronous>, transform_indices = @transform_11, window_bounds = array<i64: 16, 64>}, {pipeline_mode = #tpu.pipeline_mode<synchronous>, transform_indices = @transform_12, window_bounds = array<i64: 16, 1>}, {transform_indices = @transform_13, window_bounds = array<i64: 16, 128>}]} {
    %c0 = arith.constant 0 : index
    %c0_0 = arith.constant 0 : index
    %0 = vector.load %arg1[%c0, %c0_0] : memref<16x128xf32, #tpu.memory_space<vmem>>, vector<16x128xf32>
    %c0_1 = arith.constant 0 : index
    %c0_2 = arith.constant 0 : index
    %1 = vector.load %arg2[%c0_1, %c0_2] : memref<16x1xf32, #tpu.memory_space<vmem>>, vector<16x1xf32>
    %c0_3 = arith.constant 0 : index
    %c0_4 = arith.constant 0 : index
    %2 = vector.load %arg3[%c0_3, %c0_4] : memref<16x1xf32, #tpu.memory_space<vmem>>, vector<16x1xf32>
    %cst = arith.constant dense<0.000000e+00> : vector<128xf32>
    %3 = vector.multi_reduction <add>, %0, %cst [0] : vector<16x128xf32> to vector<128xf32>
    %4 = vector.shape_cast %3 : vector<128xf32> to vector<1x128xf32>
    %5 = arith.mulf %0, %0 : vector<16x128xf32>
    %cst_5 = arith.constant dense<0.000000e+00> : vector<128xf32>
    %6 = vector.multi_reduction <add>, %5, %cst_5 [0] : vector<16x128xf32> to vector<128xf32>
    %7 = vector.shape_cast %6 : vector<128xf32> to vector<1x128xf32>
    %cst_6 = arith.constant 6.250000e-02 : f32
    %8 = vector.broadcast %cst_6 : f32 to vector<1x128xf32>
    %9 = arith.mulf %4, %8 : vector<1x128xf32>
    %cst_7 = arith.constant 6.250000e-02 : f32
    %10 = vector.broadcast %cst_7 : f32 to vector<1x128xf32>
    %11 = arith.mulf %7, %10 : vector<1x128xf32>
    %12 = arith.mulf %9, %9 : vector<1x128xf32>
    %13 = arith.subf %11, %12 : vector<1x128xf32>
    %14 = vector.broadcast %9 : vector<1x128xf32> to vector<16x128xf32>
    %15 = arith.subf %0, %14 : vector<16x128xf32>
    %cst_8 = arith.constant 9.99999974E-6 : f32
    %16 = vector.broadcast %cst_8 : f32 to vector<1x128xf32>
    %17 = arith.addf %13, %16 : vector<1x128xf32>
    %18 = math.rsqrt %17 : vector<1x128xf32>
    %19 = vector.broadcast %18 : vector<1x128xf32> to vector<16x128xf32>
    %20 = arith.mulf %15, %19 : vector<16x128xf32>
    %21 = vector.broadcast %1 : vector<16x1xf32> to vector<16x128xf32>
    %22 = arith.mulf %20, %21 : vector<16x128xf32>
    %23 = vector.broadcast %2 : vector<16x1xf32> to vector<16x128xf32>
    %24 = arith.addf %22, %23 : vector<16x128xf32>
    %c0_9 = arith.constant 0 : index
    %c0_10 = arith.constant 0 : index
    %25 = vector.load %arg4[%c0_9, %c0_10] : memref<192x16xbf16, #tpu.memory_space<vmem>>, vector<192x16xbf16>
    %26 = arith.truncf %24 : vector<16x128xf32> to vector<16x128xbf16>
    %cst_11 = arith.constant dense<0.000000e+00> : vector<192x128xf32>
    %27 = tpu.matmul %25, %26, %cst_11 {dimension_numbers = #tpu.dot_dimension_numbers<[1], [0], [0], [1], [0, 0, 1, 1], [], []>} : vector<192x16xbf16>, vector<16x128xbf16>, vector<192x128xf32> -> vector<192x128xf32>
    %c0_12 = arith.constant 0 : index
    %c0_13 = arith.constant 0 : index
    %28 = vector.load %arg5[%c0_12, %c0_13] : memref<192x1xf32, #tpu.memory_space<vmem>>, vector<192x1xf32>
    %29 = vector.extract_strided_slice %27 {offsets = [0, 0], sizes = [16, 128], strides = [1, 1]} : vector<192x128xf32> to vector<16x128xf32>
    %30 = vector.extract_strided_slice %28 {offsets = [0, 0], sizes = [16, 1], strides = [1, 1]} : vector<192x1xf32> to vector<16x1xf32>
    %31 = vector.broadcast %30 : vector<16x1xf32> to vector<16x128xf32>
    %32 = arith.addf %29, %31 : vector<16x128xf32>
    %33 = vector.extract_strided_slice %27 {offsets = [64, 0], sizes = [16, 128], strides = [1, 1]} : vector<192x128xf32> to vector<16x128xf32>
    %34 = vector.extract_strided_slice %28 {offsets = [64, 0], sizes = [16, 1], strides = [1, 1]} : vector<192x1xf32> to vector<16x1xf32>
    %35 = vector.broadcast %34 : vector<16x1xf32> to vector<16x128xf32>
    %36 = arith.addf %33, %35 : vector<16x128xf32>
    %37 = arith.mulf %32, %36 : vector<16x128xf32>
    %38 = vector.extract_strided_slice %27 {offsets = [16, 0], sizes = [16, 128], strides = [1, 1]} : vector<192x128xf32> to vector<16x128xf32>
    %39 = vector.extract_strided_slice %28 {offsets = [16, 0], sizes = [16, 1], strides = [1, 1]} : vector<192x1xf32> to vector<16x1xf32>
    %40 = vector.broadcast %39 : vector<16x1xf32> to vector<16x128xf32>
    %41 = arith.addf %38, %40 : vector<16x128xf32>
    %42 = vector.extract_strided_slice %27 {offsets = [80, 0], sizes = [16, 128], strides = [1, 1]} : vector<192x128xf32> to vector<16x128xf32>
    %43 = vector.extract_strided_slice %28 {offsets = [80, 0], sizes = [16, 1], strides = [1, 1]} : vector<192x1xf32> to vector<16x1xf32>
    %44 = vector.broadcast %43 : vector<16x1xf32> to vector<16x128xf32>
    %45 = arith.addf %42, %44 : vector<16x128xf32>
    %46 = arith.mulf %41, %45 : vector<16x128xf32>
    %47 = vector.extract_strided_slice %27 {offsets = [32, 0], sizes = [16, 128], strides = [1, 1]} : vector<192x128xf32> to vector<16x128xf32>
    %48 = vector.extract_strided_slice %28 {offsets = [32, 0], sizes = [16, 1], strides = [1, 1]} : vector<192x1xf32> to vector<16x1xf32>
    %49 = vector.broadcast %48 : vector<16x1xf32> to vector<16x128xf32>
    %50 = arith.addf %47, %49 : vector<16x128xf32>
    %51 = vector.extract_strided_slice %27 {offsets = [96, 0], sizes = [16, 128], strides = [1, 1]} : vector<192x128xf32> to vector<16x128xf32>
    %52 = vector.extract_strided_slice %28 {offsets = [96, 0], sizes = [16, 1], strides = [1, 1]} : vector<192x1xf32> to vector<16x1xf32>
    %53 = vector.broadcast %52 : vector<16x1xf32> to vector<16x128xf32>
    %54 = arith.addf %51, %53 : vector<16x128xf32>
    %55 = arith.mulf %50, %54 : vector<16x128xf32>
    %56 = vector.extract_strided_slice %27 {offsets = [48, 0], sizes = [16, 128], strides = [1, 1]} : vector<192x128xf32> to vector<16x128xf32>
    %57 = vector.extract_strided_slice %28 {offsets = [48, 0], sizes = [16, 1], strides = [1, 1]} : vector<192x1xf32> to vector<16x1xf32>
    %58 = vector.broadcast %57 : vector<16x1xf32> to vector<16x128xf32>
    %59 = arith.addf %56, %58 : vector<16x128xf32>
    %60 = vector.extract_strided_slice %27 {offsets = [112, 0], sizes = [16, 128], strides = [1, 1]} : vector<192x128xf32> to vector<16x128xf32>
    %61 = vector.extract_strided_slice %28 {offsets = [112, 0], sizes = [16, 1], strides = [1, 1]} : vector<192x1xf32> to vector<16x1xf32>
    %62 = vector.broadcast %61 : vector<16x1xf32> to vector<16x128xf32>
    %63 = arith.addf %60, %62 : vector<16x128xf32>
    %64 = arith.mulf %59, %63 : vector<16x128xf32>
    %65 = arith.maximumf %37, %46 : vector<16x128xf32>
    %66 = arith.maximumf %55, %64 : vector<16x128xf32>
    %67 = arith.maximumf %65, %66 : vector<16x128xf32>
    %cst_14 = arith.constant 0.000000e+00 : f32
    %68 = vector.broadcast %cst_14 : f32 to vector<16x128xf32>
    %cst_15 = arith.constant 0.000000e+00 : f32
    %69 = vector.broadcast %cst_15 : f32 to vector<16x128xf32>
    %70 = arith.subf %37, %67 : vector<16x128xf32>
    %71 = math.exp %70 : vector<16x128xf32>
    %72 = arith.addf %69, %71 : vector<16x128xf32>
    %73 = vector.extract_strided_slice %27 {offsets = [128, 0], sizes = [16, 128], strides = [1, 1]} : vector<192x128xf32> to vector<16x128xf32>
    %74 = vector.extract_strided_slice %28 {offsets = [128, 0], sizes = [16, 1], strides = [1, 1]} : vector<192x1xf32> to vector<16x1xf32>
    %75 = vector.broadcast %74 : vector<16x1xf32> to vector<16x128xf32>
    %76 = arith.addf %73, %75 : vector<16x128xf32>
    %77 = arith.mulf %71, %76 : vector<16x128xf32>
    %78 = arith.addf %68, %77 : vector<16x128xf32>
    %79 = arith.subf %46, %67 : vector<16x128xf32>
    %80 = math.exp %79 : vector<16x128xf32>
    %81 = arith.addf %72, %80 : vector<16x128xf32>
    %82 = vector.extract_strided_slice %27 {offsets = [144, 0], sizes = [16, 128], strides = [1, 1]} : vector<192x128xf32> to vector<16x128xf32>
    %83 = vector.extract_strided_slice %28 {offsets = [144, 0], sizes = [16, 1], strides = [1, 1]} : vector<192x1xf32> to vector<16x1xf32>
    %84 = vector.broadcast %83 : vector<16x1xf32> to vector<16x128xf32>
    %85 = arith.addf %82, %84 : vector<16x128xf32>
    %86 = arith.mulf %80, %85 : vector<16x128xf32>
    %87 = arith.addf %78, %86 : vector<16x128xf32>
    %88 = arith.subf %55, %67 : vector<16x128xf32>
    %89 = math.exp %88 : vector<16x128xf32>
    %90 = arith.addf %81, %89 : vector<16x128xf32>
    %91 = vector.extract_strided_slice %27 {offsets = [160, 0], sizes = [16, 128], strides = [1, 1]} : vector<192x128xf32> to vector<16x128xf32>
    %92 = vector.extract_strided_slice %28 {offsets = [160, 0], sizes = [16, 1], strides = [1, 1]} : vector<192x1xf32> to vector<16x1xf32>
    %93 = vector.broadcast %92 : vector<16x1xf32> to vector<16x128xf32>
    %94 = arith.addf %91, %93 : vector<16x128xf32>
    %95 = arith.mulf %89, %94 : vector<16x128xf32>
    %96 = arith.addf %87, %95 : vector<16x128xf32>
    %97 = arith.subf %64, %67 : vector<16x128xf32>
    %98 = math.exp %97 : vector<16x128xf32>
    %99 = arith.addf %90, %98 : vector<16x128xf32>
    %100 = vector.extract_strided_slice %27 {offsets = [176, 0], sizes = [16, 128], strides = [1, 1]} : vector<192x128xf32> to vector<16x128xf32>
    %101 = vector.extract_strided_slice %28 {offsets = [176, 0], sizes = [16, 1], strides = [1, 1]} : vector<192x1xf32> to vector<16x1xf32>
    %102 = vector.broadcast %101 : vector<16x1xf32> to vector<16x128xf32>
    %103 = arith.addf %100, %102 : vector<16x128xf32>
    %104 = arith.mulf %98, %103 : vector<16x128xf32>
    %105 = arith.addf %96, %104 : vector<16x128xf32>
    %106 = tpu.reciprocal %99 {approx = true} : vector<16x128xf32> -> vector<16x128xf32>
    %107 = arith.mulf %105, %106 : vector<16x128xf32>
    %c0_16 = arith.constant 0 : index
    %c0_17 = arith.constant 0 : index
    %108 = vector.load %arg6[%c0_16, %c0_17] : memref<16x16xbf16, #tpu.memory_space<vmem>>, vector<16x16xbf16>
    %109 = arith.truncf %107 : vector<16x128xf32> to vector<16x128xbf16>
    %cst_18 = arith.constant dense<0.000000e+00> : vector<16x128xf32>
    %110 = tpu.matmul %108, %109, %cst_18 {dimension_numbers = #tpu.dot_dimension_numbers<[1], [0], [0], [1], [0, 0, 1, 1], [], []>} : vector<16x16xbf16>, vector<16x128xbf16>, vector<16x128xf32> -> vector<16x128xf32>
    %c0_19 = arith.constant 0 : index
    %c0_20 = arith.constant 0 : index
    %111 = vector.load %arg7[%c0_19, %c0_20] : memref<16x1xf32, #tpu.memory_space<vmem>>, vector<16x1xf32>
    %112 = vector.broadcast %111 : vector<16x1xf32> to vector<16x128xf32>
    %113 = arith.addf %110, %112 : vector<16x128xf32>
    %114 = arith.addf %0, %113 : vector<16x128xf32>
    %c0_21 = arith.constant 0 : index
    %c0_22 = arith.constant 0 : index
    %115 = vector.load %arg8[%c0_21, %c0_22] : memref<16x1xf32, #tpu.memory_space<vmem>>, vector<16x1xf32>
    %c0_23 = arith.constant 0 : index
    %c0_24 = arith.constant 0 : index
    %116 = vector.load %arg9[%c0_23, %c0_24] : memref<16x1xf32, #tpu.memory_space<vmem>>, vector<16x1xf32>
    %cst_25 = arith.constant dense<0.000000e+00> : vector<128xf32>
    %117 = vector.multi_reduction <add>, %114, %cst_25 [0] : vector<16x128xf32> to vector<128xf32>
    %118 = vector.shape_cast %117 : vector<128xf32> to vector<1x128xf32>
    %119 = arith.mulf %114, %114 : vector<16x128xf32>
    %cst_26 = arith.constant dense<0.000000e+00> : vector<128xf32>
    %120 = vector.multi_reduction <add>, %119, %cst_26 [0] : vector<16x128xf32> to vector<128xf32>
    %121 = vector.shape_cast %120 : vector<128xf32> to vector<1x128xf32>
    %cst_27 = arith.constant 6.250000e-02 : f32
    %122 = vector.broadcast %cst_27 : f32 to vector<1x128xf32>
    %123 = arith.mulf %118, %122 : vector<1x128xf32>
    %cst_28 = arith.constant 6.250000e-02 : f32
    %124 = vector.broadcast %cst_28 : f32 to vector<1x128xf32>
    %125 = arith.mulf %121, %124 : vector<1x128xf32>
    %126 = arith.mulf %123, %123 : vector<1x128xf32>
    %127 = arith.subf %125, %126 : vector<1x128xf32>
    %128 = vector.broadcast %123 : vector<1x128xf32> to vector<16x128xf32>
    %129 = arith.subf %114, %128 : vector<16x128xf32>
    %cst_29 = arith.constant 9.99999974E-6 : f32
    %130 = vector.broadcast %cst_29 : f32 to vector<1x128xf32>
    %131 = arith.addf %127, %130 : vector<1x128xf32>
    %132 = math.rsqrt %131 : vector<1x128xf32>
    %133 = vector.broadcast %132 : vector<1x128xf32> to vector<16x128xf32>
    %134 = arith.mulf %129, %133 : vector<16x128xf32>
    %135 = vector.broadcast %115 : vector<16x1xf32> to vector<16x128xf32>
    %136 = arith.mulf %134, %135 : vector<16x128xf32>
    %137 = vector.broadcast %116 : vector<16x1xf32> to vector<16x128xf32>
    %138 = arith.addf %136, %137 : vector<16x128xf32>
    %c0_30 = arith.constant 0 : index
    %c0_31 = arith.constant 0 : index
    %139 = vector.load %arg10[%c0_30, %c0_31] : memref<64x16xbf16, #tpu.memory_space<vmem>>, vector<64x16xbf16>
    %140 = arith.truncf %138 : vector<16x128xf32> to vector<16x128xbf16>
    %cst_32 = arith.constant dense<0.000000e+00> : vector<64x128xf32>
    %141 = tpu.matmul %139, %140, %cst_32 {dimension_numbers = #tpu.dot_dimension_numbers<[1], [0], [0], [1], [0, 0, 1, 1], [], []>} : vector<64x16xbf16>, vector<16x128xbf16>, vector<64x128xf32> -> vector<64x128xf32>
    %c0_33 = arith.constant 0 : index
    %c0_34 = arith.constant 0 : index
    %142 = vector.load %arg11[%c0_33, %c0_34] : memref<64x1xf32, #tpu.memory_space<vmem>>, vector<64x1xf32>
    %143 = vector.broadcast %142 : vector<64x1xf32> to vector<64x128xf32>
    %144 = arith.addf %141, %143 : vector<64x128xf32>
    %cst_35 = arith.constant 5.000000e-01 : f32
    %145 = vector.broadcast %cst_35 : f32 to vector<64x128xf32>
    %146 = arith.mulf %145, %144 : vector<64x128xf32>
    %cst_36 = arith.constant 0.707106769 : f32
    %147 = vector.broadcast %cst_36 : f32 to vector<64x128xf32>
    %148 = arith.mulf %144, %147 : vector<64x128xf32>
    %149 = math.erf %148 : vector<64x128xf32>
    %cst_37 = arith.constant 1.000000e+00 : f32
    %150 = vector.broadcast %cst_37 : f32 to vector<64x128xf32>
    %151 = arith.addf %150, %149 : vector<64x128xf32>
    %152 = arith.mulf %146, %151 : vector<64x128xf32>
    %c0_38 = arith.constant 0 : index
    %c0_39 = arith.constant 0 : index
    %153 = vector.load %arg12[%c0_38, %c0_39] : memref<16x64xbf16, #tpu.memory_space<vmem>>, vector<16x64xbf16>
    %154 = arith.truncf %152 : vector<64x128xf32> to vector<64x128xbf16>
    %cst_40 = arith.constant dense<0.000000e+00> : vector<16x128xf32>
    %155 = tpu.matmul %153, %154, %cst_40 {dimension_numbers = #tpu.dot_dimension_numbers<[1], [0], [0], [1], [0, 0, 1, 1], [], []>} : vector<16x64xbf16>, vector<64x128xbf16>, vector<16x128xf32> -> vector<16x128xf32>
    %c0_41 = arith.constant 0 : index
    %c0_42 = arith.constant 0 : index
    %156 = vector.load %arg13[%c0_41, %c0_42] : memref<16x1xf32, #tpu.memory_space<vmem>>, vector<16x1xf32>
    %157 = vector.broadcast %156 : vector<16x1xf32> to vector<16x128xf32>
    %158 = arith.addf %155, %157 : vector<16x128xf32>
    %159 = arith.addf %114, %158 : vector<16x128xf32>
    %c0_43 = arith.constant 0 : index
    %c0_44 = arith.constant 0 : index
    %160 = vector.load %arg14[%c0_43, %c0_44] : memref<16x128xf32, #tpu.memory_space<vmem>>, vector<16x128xf32>
    tpu.vector_store %arg14[%c0_43, %c0_44], %159 {strides = array<i32>} : memref<16x128xf32, #tpu.memory_space<vmem>>, vector<16x128xf32>,
    return
  }
  func.func @transform_0(%arg0: i32) -> (i32, i32) {
    %c0_i32 = arith.constant 0 : i32
    %c0_i32_0 = arith.constant 0 : i32
    return %c0_i32, %arg0 : i32, i32
  }
  func.func @transform_1(%arg0: i32) -> (i32, i32) {
    %c0_i32 = arith.constant 0 : i32
    %c0_i32_0 = arith.constant 0 : i32
    %c0_i32_1 = arith.constant 0 : i32
    return %c0_i32, %c0_i32_0 : i32, i32
  }
  func.func @transform_2(%arg0: i32) -> (i32, i32) {
    %c0_i32 = arith.constant 0 : i32
    %c0_i32_0 = arith.constant 0 : i32
    %c0_i32_1 = arith.constant 0 : i32
    return %c0_i32, %c0_i32_0 : i32, i32
  }
  func.func @transform_3(%arg0: i32) -> (i32, i32) {
    %c0_i32 = arith.constant 0 : i32
    %c0_i32_0 = arith.constant 0 : i32
    %c0_i32_1 = arith.constant 0 : i32
    return %c0_i32, %c0_i32_0 : i32, i32
  }
  func.func @transform_4(%arg0: i32) -> (i32, i32) {
    %c0_i32 = arith.constant 0 : i32
    %c0_i32_0 = arith.constant 0 : i32
    %c0_i32_1 = arith.constant 0 : i32
    return %c0_i32, %c0_i32_0 : i32, i32
  }
  func.func @transform_5(%arg0: i32) -> (i32, i32) {
    %c0_i32 = arith.constant 0 : i32
    %c0_i32_0 = arith.constant 0 : i32
    %c0_i32_1 = arith.constant 0 : i32
    return %c0_i32, %c0_i32_0 : i32, i32
  }
  func.func @transform_6(%arg0: i32) -> (i32, i32) {
    %c0_i32 = arith.constant 0 : i32
    %c0_i32_0 = arith.constant 0 : i32
    %c0_i32_1 = arith.constant 0 : i32
    return %c0_i32, %c0_i32_0 : i32, i32
  }
  func.func @transform_7(%arg0: i32) -> (i32, i32) {
    %c0_i32 = arith.constant 0 : i32
    %c0_i32_0 = arith.constant 0 : i32
    %c0_i32_1 = arith.constant 0 : i32
    return %c0_i32, %c0_i32_0 : i32, i32
  }
  func.func @transform_8(%arg0: i32) -> (i32, i32) {
    %c0_i32 = arith.constant 0 : i32
    %c0_i32_0 = arith.constant 0 : i32
    %c0_i32_1 = arith.constant 0 : i32
    return %c0_i32, %c0_i32_0 : i32, i32
  }
  func.func @transform_9(%arg0: i32) -> (i32, i32) {
    %c0_i32 = arith.constant 0 : i32
    %c0_i32_0 = arith.constant 0 : i32
    %c0_i32_1 = arith.constant 0 : i32
    return %c0_i32, %c0_i32_0 : i32, i32
  }
  func.func @transform_10(%arg0: i32) -> (i32, i32) {
    %c0_i32 = arith.constant 0 : i32
    %c0_i32_0 = arith.constant 0 : i32
    %c0_i32_1 = arith.constant 0 : i32
    return %c0_i32, %c0_i32_0 : i32, i32
  }
  func.func @transform_11(%arg0: i32) -> (i32, i32) {
    %c0_i32 = arith.constant 0 : i32
    %c0_i32_0 = arith.constant 0 : i32
    %c0_i32_1 = arith.constant 0 : i32
    return %c0_i32, %c0_i32_0 : i32, i32
  }
  func.func @transform_12(%arg0: i32) -> (i32, i32) {
    %c0_i32 = arith.constant 0 : i32
    %c0_i32_0 = arith.constant 0 : i32
    %c0_i32_1 = arith.constant 0 : i32
    return %c0_i32, %c0_i32_0 : i32, i32
  }
  func.func @transform_13(%arg0: i32) -> (i32, i32) {
    %c0_i32 = arith.constant 0 : i32
    %c0_i32_0 = arith.constant 0 : i32
    return %c0_i32, %arg0 : i32, i32
  }
}

</mosaic_0001>

<llo_original>
// kernel: tpu_custom_call.1
$region0: #{tpu_custom_call.1}
  #allocation0 [shape = 'u32[]', space=smem, size = 0x4, offset = 0x4, fixed_abs, tag = 'smem constant byte address 0x4 - core index']
  #allocation1 [shape = 'u32[144,128]{1,0:T(1,128)}', space=vmem, size = 0x12000, scoped, tag = 'internal scratch']
  %s0 = inlined_call_operand.vmem [shape: f32[16,128], index: 0, kind: input, shape index: {}]
  %s1 = inlined_call_operand.vmem [shape: f32[16,1], index: 1, kind: input, shape index: {}]
  %s2 = inlined_call_operand.vmem [shape: f32[16,1], index: 2, kind: input, shape index: {}]
  %s3 = inlined_call_operand.vmem [shape: bf16[192,16], index: 3, kind: input, shape index: {}]
  %s4 = inlined_call_operand.vmem [shape: f32[192,1], index: 4, kind: input, shape index: {}]
  %s5 = inlined_call_operand.vmem [shape: bf16[16,16], index: 5, kind: input, shape index: {}]
  %s6 = inlined_call_operand.vmem [shape: f32[16,1], index: 6, kind: input, shape index: {}]
  %s7 = inlined_call_operand.vmem [shape: f32[16,1], index: 7, kind: input, shape index: {}]
  %s8 = inlined_call_operand.vmem [shape: f32[16,1], index: 8, kind: input, shape index: {}]
  %s9 = inlined_call_operand.vmem [shape: bf16[64,16], index: 9, kind: input, shape index: {}]
  %s10 = inlined_call_operand.vmem [shape: f32[64,1], index: 10, kind: input, shape index: {}]
  %s11 = inlined_call_operand.vmem [shape: bf16[16,64], index: 11, kind: input, shape index: {}]
  %s12 = inlined_call_operand.vmem [shape: f32[16,1], index: 12, kind: input, shape index: {}]
  %s13 = inlined_call_operand.hbm [shape: f32[16,128], index: 13, kind: output, shape index: {}]
  %s14 = sld [smem:[#allocation0]]
  $region62: #{tpu_custom_call.1} parent=0
    _
  %s16 = ssub.s32 1, %s14
  %s17 = scalar_select 0, %s16, %s14
  $region1: #{tpu_custom_call.1} parent=0
    #allocation2 [shape = 'u8[8192]{0}', space=vmem, size = 0x2000, scoped, tag = 'output window, operand 0, single buffered']
    #allocation3 [shape = 's32[1]{0}', space=sflag, size = 0x4, scoped, tag = 'scoped memory for tpu_custom_call.1']
    %18 = vsyncpa [#allocation3], 0
    // Predicated region
    $region2: #{tpu_custom_call.1} parent=1 // pred_check
      _
    $region3: #{tpu_custom_call.1} parent=1 // pred_check_branch
      %20 = sbr.rel (0) target = $region5
    $region4: #{tpu_custom_call.1} parent=1 // pred_region
      _
    $region5: #{tpu_custom_call.1} parent=1 // pred_fallthru
      _
    // Predicated region
    $region6: #{tpu_custom_call.1} parent=1 // pred_check
      _
    $region7: #{tpu_custom_call.1} parent=1 // pred_check_branch
      %22 = sbr.rel (0) target = $region9
    $region8: #{tpu_custom_call.1} parent=1 // pred_region
      _
    $region9: #{tpu_custom_call.1} parent=1 // pred_fallthru
      _
    // Predicated region
    $region10: #{tpu_custom_call.1} parent=1 // pred_check
      _
    $region11: #{tpu_custom_call.1} parent=1 // pred_check_branch
      %24 = sbr.rel (0) target = $region13
    $region12: #{tpu_custom_call.1} parent=1 // pred_region
      _
    $region13: #{tpu_custom_call.1} parent=1 // pred_fallthru
      _
    // Predicated region
    $region14: #{tpu_custom_call.1} parent=1 // pred_check
      _
    $region15: #{tpu_custom_call.1} parent=1 // pred_check_branch
      %26 = sbr.rel (0) target = $region17
    $region16: #{tpu_custom_call.1} parent=1 // pred_region
      _
    $region17: #{tpu_custom_call.1} parent=1 // pred_fallthru
      _
    // Predicated region
    $region18: #{tpu_custom_call.1} parent=1 // pred_check
      _
    $region19: #{tpu_custom_call.1} parent=1 // pred_check_branch
      %28 = sbr.rel (0) target = $region21
    $region20: #{tpu_custom_call.1} parent=1 // pred_region
      _
    $region21: #{tpu_custom_call.1} parent=1 // pred_fallthru
      _
    // Predicated region
    $region22: #{tpu_custom_call.1} parent=1 // pred_check
      _
    $region23: #{tpu_custom_call.1} parent=1 // pred_check_branch
      %30 = sbr.rel (0) target = $region25
    $region24: #{tpu_custom_call.1} parent=1 // pred_region
      _
    $region25: #{tpu_custom_call.1} parent=1 // pred_fallthru
      _
    // Predicated region
    $region26: #{tpu_custom_call.1} parent=1 // pred_check
      _
    $region27: #{tpu_custom_call.1} parent=1 // pred_check_branch
      %32 = sbr.rel (0) target = $region29
    $region28: #{tpu_custom_call.1} parent=1 // pred_region
      _
    $region29: #{tpu_custom_call.1} parent=1 // pred_fallthru
      _
    // Predicated region
    $region30: #{tpu_custom_call.1} parent=1 // pred_check
      _
    $region31: #{tpu_custom_call.1} parent=1 // pred_check_branch
      %34 = sbr.rel (0) target = $region33
    $region32: #{tpu_custom_call.1} parent=1 // pred_region
      _
    $region33: #{tpu_custom_call.1} parent=1 // pred_fallthru
      _
    // Predicated region
    $region34: #{tpu_custom_call.1} parent=1 // pred_check
      _
    $region35: #{tpu_custom_call.1} parent=1 // pred_check_branch
      %36 = sbr.rel (0) target = $region37
    $region36: #{tpu_custom_call.1} parent=1 // pred_region
      _
    $region37: #{tpu_custom_call.1} parent=1 // pred_fallthru
      _
    // Predicated region
    $region38: #{tpu_custom_call.1} parent=1 // pred_check
      _
    $region39: #{tpu_custom_call.1} parent=1 // pred_check_branch
      %38 = sbr.rel (0) target = $region41
    $region40: #{tpu_custom_call.1} parent=1 // pred_region
      _
    $region41: #{tpu_custom_call.1} parent=1 // pred_fallthru
      _
    // Predicated region
    $region42: #{tpu_custom_call.1} parent=1 // pred_check
      _
    $region43: #{tpu_custom_call.1} parent=1 // pred_check_branch
      %40 = sbr.rel (0) target = $region45
    $region44: #{tpu_custom_call.1} parent=1 // pred_region
      _
    $region45: #{tpu_custom_call.1} parent=1 // pred_fallthru
      _
    // Predicated region
    $region46: #{tpu_custom_call.1} parent=1 // pred_check
      _
    $region47: #{tpu_custom_call.1} parent=1 // pred_check_branch
      %42 = sbr.rel (0) target = $region49
    $region48: #{tpu_custom_call.1} parent=1 // pred_region
      _
    $region49: #{tpu_custom_call.1} parent=1 // pred_fallthru
      _
    // Predicated region
    $region50: #{tpu_custom_call.1} parent=1 // pred_check
      _
    $region51: #{tpu_custom_call.1} parent=1 // pred_check_branch
      %44 = sbr.rel (0) target = $region53
    $region52: #{tpu_custom_call.1} parent=1 // pred_region
      _
    $region53: #{tpu_custom_call.1} parent=1 // pred_fallthru
      _
    %v46 = vld [vmem:[%s0] sm:$0xff]
    %v47 = vld [vmem:[%s0 + $0x8] sm:$0xff]
    %v48 = vld [vmem:[%s1] sm:$0xff]
    %v49 = vld [vmem:[%s1 + $0x8] sm:$0xff]
    %v50 = vld [vmem:[%s2] sm:$0xff]
    %v51 = vld [vmem:[%s2 + $0x8] sm:$0xff]
    %v52 = vadd.f32 %v46, %v47
    %v53 = vrot.slane %v52, 4
    %v54 = vadd.f32 %v52, %v53
    %v55 = vrot.slane %v54, 2
    %v56 = vadd.f32 %v54, %v55
    %v57 = vrot.slane %v56, 1
    %v58 = vadd.f32 %v56, %v57
    %v59 = vmul.f32 %v46, %v46
    %v60 = vmul.f32 %v47, %v47
    %v61 = vadd.f32 %v59, %v60
    %v62 = vrot.slane %v61, 4
    %v63 = vadd.f32 %v61, %v62
    %v64 = vrot.slane %v63, 2
    %v65 = vadd.f32 %v63, %v64
    %v66 = vrot.slane %v65, 1
    %v67 = vadd.f32 %v65, %v66
    %v68 = vmul.f32 %v58, 0.0625
    %v69 = vmul.f32 %v67, 0.0625
    %v70 = vmul.f32 %v68, %v68
    %v71 = vsub.f32 %v69, %v70
    %v72 = vsub.f32 %v46, %v68
    %v73 = vsub.f32 %v47, %v68
    %v74 = vadd.f32 %v71, 1e-05
    %v75 = vrsqrt.pop %v74
    %v76 = vmul.f32 %v72, %v75
    %v77 = vmul.f32 %v73, %v75
    %79 = vset.pattern.permute.xlu0 0
    %80 = vperm.xlu0 %79, %v48
    %v81 = vpop.permute.xlu0 %80
    %84 = vset.pattern.permute.xlu0 0
    %85 = vperm.xlu0 %84, %v49
    %v86 = vpop.permute.xlu0 %85
    %v88 = vmul.f32 %v76, %v81
    %v89 = vmul.f32 %v77, %v86
    %91 = vset.pattern.permute.xlu0 0
    %92 = vperm.xlu0 %91, %v50
    %v93 = vpop.permute.xlu0 %92
    %96 = vset.pattern.permute.xlu0 0
    %97 = vperm.xlu0 %96, %v51
    %v98 = vpop.permute.xlu0 %97
    %v100 = vadd.f32 %v88, %v93
    %v101 = vadd.f32 %v89, %v98
    %v102 = vld [vmem:[%s3] sm:$0xf]
    %v103 = vld [vmem:[%s3 + $0x4] sm:$0xf]
    %v104 = vld [vmem:[%s3 + $0x8] sm:$0xf]
    %v105 = vld [vmem:[%s3 + $0xc] sm:$0xf]
    %v106 = vld [vmem:[%s3 + $0x10] sm:$0xf]
    %v107 = vld [vmem:[%s3 + $0x14] sm:$0xf]
    %v108 = vld [vmem:[%s3 + $0x18] sm:$0xf]
    %v109 = vld [vmem:[%s3 + $0x1c] sm:$0xf]
    %v110 = vld [vmem:[%s3 + $0x20] sm:$0xf]
    %v111 = vld [vmem:[%s3 + $0x24] sm:$0xf]
    %v112 = vld [vmem:[%s3 + $0x28] sm:$0xf]
    %v113 = vld [vmem:[%s3 + $0x2c] sm:$0xf]
    %v114 = vld [vmem:[%s3 + $0x30] sm:$0xf]
    %v115 = vld [vmem:[%s3 + $0x34] sm:$0xf]
    %v116 = vld [vmem:[%s3 + $0x38] sm:$0xf]
    %v117 = vld [vmem:[%s3 + $0x3c] sm:$0xf]
    %v118 = vld [vmem:[%s3 + $0x40] sm:$0xf]
    %v119 = vld [vmem:[%s3 + $0x44] sm:$0xf]
    %v120 = vld [vmem:[%s3 + $0x48] sm:$0xf]
    %v121 = vld [vmem:[%s3 + $0x4c] sm:$0xf]
    %v122 = vld [vmem:[%s3 + $0x50] sm:$0xf]
    %v123 = vld [vmem:[%s3 + $0x54] sm:$0xf]
    %v124 = vld [vmem:[%s3 + $0x58] sm:$0xf]
    %v125 = vld [vmem:[%s3 + $0x5c] sm:$0xf]
    %v126 = vpack.c.bf16 %v101, %v100
    %v151 = vunpack.c.l.b16 %v102
    %v152 = vunpack.c.l.b16 %v103
    %v153 = vunpack.c.l.b16 %v104
    %v154 = vunpack.c.l.b16 %v105
    %v155 = vunpack.c.l.b16 %v106
    %v156 = vunpack.c.l.b16 %v107
    %v157 = vunpack.c.l.b16 %v108
    %v158 = vunpack.c.l.b16 %v109
    %v159 = vunpack.c.l.b16 %v110
    %v160 = vunpack.c.l.b16 %v111
    %v161 = vunpack.c.l.b16 %v112
    %v162 = vunpack.c.l.b16 %v113
    %v163 = vunpack.c.l.b16 %v114
    %v164 = vunpack.c.l.b16 %v115
    %v165 = vunpack.c.l.b16 %v116
    %v166 = vunpack.c.l.b16 %v117
    %v167 = vunpack.c.l.b16 %v118
    %v168 = vunpack.c.l.b16 %v119
    %v169 = vunpack.c.l.b16 %v120
    %v170 = vunpack.c.l.b16 %v121
    %v171 = vunpack.c.l.b16 %v122
    %v172 = vunpack.c.l.b16 %v123
    %v173 = vunpack.c.l.b16 %v124
    %v174 = vunpack.c.l.b16 %v125
    %v175 = vpack.c.b16 %v152, %v151
    %v176 = vpack.c.b16 %v154, %v153
    %v177 = vpack.c.b16 %v156, %v155
    %v178 = vpack.c.b16 %v158, %v157
    %v179 = vpack.c.b16 %v160, %v159
    %v180 = vpack.c.b16 %v162, %v161
    %v181 = vpack.c.b16 %v164, %v163
    %v182 = vpack.c.b16 %v166, %v165
    %v183 = vpack.c.b16 %v168, %v167
    %v184 = vpack.c.b16 %v170, %v169
    %v185 = vpack.c.b16 %v172, %v171
    %v186 = vpack.c.b16 %v174, %v173
    %vm187 = vcmask 130048
    %v189 = vsel %vm187, %v175, 0
    %v192 = vsel %vm187, %v176, 0
    %v195 = vsel %vm187, %v177, 0
    %v198 = vsel %vm187, %v178, 0
    %v201 = vsel %vm187, %v179, 0
    %v204 = vsel %vm187, %v180, 0
    %v207 = vsel %vm187, %v181, 0
    %v210 = vsel %vm187, %v182, 0
    %v213 = vsel %vm187, %v183, 0
    %v216 = vsel %vm187, %v184, 0
    %v219 = vsel %vm187, %v185, 0
    %v222 = vsel %vm187, %v186, 0
    %224 = vmatprep.subr.bf16.mxu0 0
    %225 = vmatpush1.bf16.msra.mxu0 0
    %226 = vmatprep.subr.bf16.mxu0 0
    %227 = vmatpush1.bf16.msra.mxu0 0
    %228 = vmatprep.subr.bf16.mxu0 0
    %229 = vmatpush1.bf16.msra.mxu0 0
    %230 = vmatprep.subr.bf16.mxu0 0
    %231 = vmatpush1.bf16.msra.mxu0 0
    %232 = vmatprep.subr.bf16.mxu0 0
    %233 = vmatpush1.bf16.msra.mxu0 0
    %234 = vmatprep.subr.bf16.mxu0 0
    %235 = vmatpush1.bf16.msra.mxu0 0
    %236 = vmatprep.subr.bf16.mxu0 0
    %237 = vmatpush1.bf16.msra.mxu0 0
    %238 = vmatprep.subr.bf16.mxu0 0
    %239 = vmatpush1.bf16.msra.mxu0 %v126
    %240 = vmatprep.subr.bf16.mxu0 0
    %241 = vmatpush2.bf16.msra.mxu0 0
    %242 = vmatprep.subr.bf16.mxu0 0
    %243 = vmatpush2.bf16.msra.mxu0 0
    %244 = vmatprep.subr.bf16.mxu0 0
    %245 = vmatpush2.bf16.msra.mxu0 0
    %246 = vmatprep.subr.bf16.mxu0 0
    %247 = vmatpush2.bf16.msra.mxu0 0
    %248 = vmatprep.subr.bf16.mxu0 0
    %249 = vmatpush2.bf16.msra.mxu0 0
    %250 = vmatprep.subr.bf16.mxu0 0
    %251 = vmatpush2.bf16.msra.mxu0 0
    %252 = vmatprep.subr.bf16.mxu0 0
    %253 = vmatpush2.bf16.msra.mxu0 0
    %254 = vmatprep.subr.bf16.mxu0 0
    %255 = vmatpush2.bf16.msra.mxu0 0
    %256 = vmatprep.mubr.bf16.mxu0 0
    %257 = vmatmul.mubr.bf16.gmra.mxu0 %v189
    %v258 = vpop.f32.mrf.mxu0
    %v259 = vadd.f32 0.0, %v258
    %v260 = vpop.f32.mrf.mxu0
    %v261 = vpop.f32.mrf.mxu0
    %v262 = vadd.f32 0.0, %v261
    %v263 = vpop.f32.mrf.mxu0
    %264 = vmatprep.mubr.bf16.mxu0 0
    %265 = vmatmul.mubr.bf16.gmra.mxu0 %v192
    %v266 = vpop.f32.mrf.mxu0
    %v267 = vadd.f32 0.0, %v266
    %v268 = vpop.f32.mrf.mxu0
    %v269 = vpop.f32.mrf.mxu0
    %v270 = vadd.f32 0.0, %v269
    %v271 = vpop.f32.mrf.mxu0
    %272 = vmatprep.mubr.bf16.mxu0 0
    %273 = vmatmul.mubr.bf16.gmra.mxu0 %v195
    %v274 = vpop.f32.mrf.mxu0
    %v275 = vadd.f32 0.0, %v274
    %v276 = vpop.f32.mrf.mxu0
    %v277 = vpop.f32.mrf.mxu0
    %v278 = vadd.f32 0.0, %v277
    %v279 = vpop.f32.mrf.mxu0
    %280 = vmatprep.mubr.bf16.mxu0 0
    %281 = vmatmul.mubr.bf16.gmra.mxu0 %v198
    %v282 = vpop.f32.mrf.mxu0
    %v283 = vadd.f32 0.0, %v282
    %v284 = vpop.f32.mrf.mxu0
    %v285 = vpop.f32.mrf.mxu0
    %v286 = vadd.f32 0.0, %v285
    %v287 = vpop.f32.mrf.mxu0
    %288 = vmatprep.mubr.bf16.mxu0 0
    %289 = vmatmul.mubr.bf16.gmra.mxu0 %v201
    %v290 = vpop.f32.mrf.mxu0
    %v291 = vadd.f32 0.0, %v290
    %v292 = vpop.f32.mrf.mxu0
    %v293 = vpop.f32.mrf.mxu0
    %v294 = vadd.f32 0.0, %v293
    %v295 = vpop.f32.mrf.mxu0
    %296 = vmatprep.mubr.bf16.mxu0 0
    %297 = vmatmul.mubr.bf16.gmra.mxu0 %v204
    %v298 = vpop.f32.mrf.mxu0
    %v299 = vadd.f32 0.0, %v298
    %v300 = vpop.f32.mrf.mxu0
    %v301 = vpop.f32.mrf.mxu0
    %v302 = vadd.f32 0.0, %v301
    %v303 = vpop.f32.mrf.mxu0
    %304 = vmatprep.mubr.bf16.mxu0 0
    %305 = vmatmul.mubr.bf16.gmra.mxu0 %v207
    %v306 = vpop.f32.mrf.mxu0
    %v307 = vadd.f32 0.0, %v306
    %v308 = vpop.f32.mrf.mxu0
    %v309 = vpop.f32.mrf.mxu0
    %v310 = vadd.f32 0.0, %v309
    %v311 = vpop.f32.mrf.mxu0
    %312 = vmatprep.mubr.bf16.mxu0 0
    %313 = vmatmul.mubr.bf16.gmra.mxu0 %v210
    %v314 = vpop.f32.mrf.mxu0
    %v315 = vadd.f32 0.0, %v314
    %v316 = vpop.f32.mrf.mxu0
    %v317 = vpop.f32.mrf.mxu0
    %v318 = vadd.f32 0.0, %v317
    %v319 = vpop.f32.mrf.mxu0
    %320 = vmatprep.mubr.bf16.mxu0 0
    %321 = vmatmul.mubr.bf16.gmra.mxu0 %v213
    %v322 = vpop.f32.mrf.mxu0
    %v323 = vadd.f32 0.0, %v322
    %v324 = vpop.f32.mrf.mxu0
    %v325 = vpop.f32.mrf.mxu0
    %v326 = vadd.f32 0.0, %v325
    %v327 = vpop.f32.mrf.mxu0
    %328 = vmatprep.mubr.bf16.mxu0 0
    %329 = vmatmul.mubr.bf16.gmra.mxu0 %v216
    %v330 = vpop.f32.mrf.mxu0
    %v331 = vadd.f32 0.0, %v330
    %v332 = vpop.f32.mrf.mxu0
    %v333 = vpop.f32.mrf.mxu0
    %v334 = vadd.f32 0.0, %v333
    %v335 = vpop.f32.mrf.mxu0
    %336 = vmatprep.mubr.bf16.mxu0 0
    %337 = vmatmul.mubr.bf16.gmra.mxu0 %v219
    %v338 = vpop.f32.mrf.mxu0
    %v339 = vadd.f32 0.0, %v338
    %v340 = vpop.f32.mrf.mxu0
    %v341 = vpop.f32.mrf.mxu0
    %v342 = vadd.f32 0.0, %v341
    %v343 = vpop.f32.mrf.mxu0
    %344 = vmatprep.mubr.bf16.mxu0 0
    %345 = vmatmul.mubr.bf16.gmra.mxu0 %v222
    %v346 = vpop.f32.mrf.mxu0
    %v347 = vadd.f32 0.0, %v346
    %v348 = vpop.f32.mrf.mxu0
    %v349 = vpop.f32.mrf.mxu0
    %v350 = vadd.f32 0.0, %v349
    %v351 = vpop.f32.mrf.mxu0
    %352 = vdwg.mxu0
    %v353 = vld [vmem:[%s4] sm:$0xff]
    %v354 = vld [vmem:[%s4 + $0x8] sm:$0xff]
    %v355 = vld [vmem:[%s4 + $0x10] sm:$0xff]
    %v356 = vld [vmem:[%s4 + $0x18] sm:$0xff]
    %v357 = vld [vmem:[%s4 + $0x20] sm:$0xff]
    %v358 = vld [vmem:[%s4 + $0x28] sm:$0xff]
    %v359 = vld [vmem:[%s4 + $0x30] sm:$0xff]
    %v360 = vld [vmem:[%s4 + $0x38] sm:$0xff]
    %v361 = vld [vmem:[%s4 + $0x40] sm:$0xff]
    %v362 = vld [vmem:[%s4 + $0x48] sm:$0xff]
    %v363 = vld [vmem:[%s4 + $0x50] sm:$0xff]
    %v364 = vld [vmem:[%s4 + $0x58] sm:$0xff]
    %v365 = vld [vmem:[%s4 + $0x60] sm:$0xff]
    %v366 = vld [vmem:[%s4 + $0x68] sm:$0xff]
    %v367 = vld [vmem:[%s4 + $0x70] sm:$0xff]
    %v368 = vld [vmem:[%s4 + $0x78] sm:$0xff]
    %v369 = vld [vmem:[%s4 + $0x80] sm:$0xff]
    %v370 = vld [vmem:[%s4 + $0x88] sm:$0xff]
    %v371 = vld [vmem:[%s4 + $0x90] sm:$0xff]
    %v372 = vld [vmem:[%s4 + $0x98] sm:$0xff]
    %v373 = vld [vmem:[%s4 + $0xa0] sm:$0xff]
    %v374 = vld [vmem:[%s4 + $0xa8] sm:$0xff]
    %v375 = vld [vmem:[%s4 + $0xb0] sm:$0xff]
    %v376 = vld [vmem:[%s4 + $0xb8] sm:$0xff]
    %378 = vset.pattern.permute.xlu0 0
    %379 = vperm.xlu0 %378, %v353
    %v380 = vpop.permute.xlu0 %379
    %383 = vset.pattern.permute.xlu0 0
    %384 = vperm.xlu0 %383, %v354
    %v385 = vpop.permute.xlu0 %384
    %v387 = vadd.f32 %v259, %v380
    %v388 = vadd.f32 %v262, %v385
    %390 = vset.pattern.permute.xlu0 0
    %391 = vperm.xlu0 %390, %v361
    %v392 = vpop.permute.xlu0 %391
    %395 = vset.pattern.permute.xlu0 0
    %396 = vperm.xlu0 %395, %v362
    %v397 = vpop.permute.xlu0 %396
    %v399 = vadd.f32 %v291, %v392
    %v400 = vadd.f32 %v294, %v397
    %v401 = vmul.f32 %v387, %v399
    %v402 = vmul.f32 %v388, %v400
    %404 = vset.pattern.permute.xlu0 0
    %405 = vperm.xlu0 %404, %v355
    %v406 = vpop.permute.xlu0 %405
    %409 = vset.pattern.permute.xlu0 0
    %410 = vperm.xlu0 %409, %v356
    %v411 = vpop.permute.xlu0 %410
    %v413 = vadd.f32 %v267, %v406
    %v414 = vadd.f32 %v270, %v411
    %416 = vset.pattern.permute.xlu0 0
    %417 = vperm.xlu0 %416, %v363
    %v418 = vpop.permute.xlu0 %417
    %421 = vset.pattern.permute.xlu0 0
    %422 = vperm.xlu0 %421, %v364
    %v423 = vpop.permute.xlu0 %422
    %v425 = vadd.f32 %v299, %v418
    %v426 = vadd.f32 %v302, %v423
    %v427 = vmul.f32 %v413, %v425
    %v428 = vmul.f32 %v414, %v426
    %430 = vset.pattern.permute.xlu0 0
    %431 = vperm.xlu0 %430, %v357
    %v432 = vpop.permute.xlu0 %431
    %435 = vset.pattern.permute.xlu0 0
    %436 = vperm.xlu0 %435, %v358
    %v437 = vpop.permute.xlu0 %436
    %v439 = vadd.f32 %v275, %v432
    %v440 = vadd.f32 %v278, %v437
    %442 = vset.pattern.permute.xlu0 0
    %443 = vperm.xlu0 %442, %v365
    %v444 = vpop.permute.xlu0 %443
    %447 = vset.pattern.permute.xlu0 0
    %448 = vperm.xlu0 %447, %v366
    %v449 = vpop.permute.xlu0 %448
    %v451 = vadd.f32 %v307, %v444
    %v452 = vadd.f32 %v310, %v449
    %v453 = vmul.f32 %v439, %v451
    %v454 = vmul.f32 %v440, %v452
    %456 = vset.pattern.permute.xlu0 0
    %457 = vperm.xlu0 %456, %v359
    %v458 = vpop.permute.xlu0 %457
    %461 = vset.pattern.permute.xlu0 0
    %462 = vperm.xlu0 %461, %v360
    %v463 = vpop.permute.xlu0 %462
    %v465 = vadd.f32 %v283, %v458
    %v466 = vadd.f32 %v286, %v463
    %468 = vset.pattern.permute.xlu0 0
    %469 = vperm.xlu0 %468, %v367
    %v470 = vpop.permute.xlu0 %469
    %473 = vset.pattern.permute.xlu0 0
    %474 = vperm.xlu0 %473, %v368
    %v475 = vpop.permute.xlu0 %474
    %v477 = vadd.f32 %v315, %v470
    %v478 = vadd.f32 %v318, %v475
    %v479 = vmul.f32 %v465, %v477
    %v480 = vmul.f32 %v466, %v478
    %v481 = vmax.f32 %v401, %v427
    %v482 = vmax.f32 %v402, %v428
    %v483 = vmax.f32 %v453, %v479
    %v484 = vmax.f32 %v454, %v480
    %v485 = vmax.f32 %v481, %v483
    %v486 = vmax.f32 %v482, %v484
    %v487 = vsub.f32 %v401, %v485
    %v488 = vsub.f32 %v402, %v486
    %v489 = vmul.f32 %v487, 1.442695
    %v490 = vpow.pop %v489
    %v491 = vmul.f32 %v488, 1.442695
    %v492 = vpow.pop %v491
    %v493 = vadd.f32 %v490, 0.0
    %v494 = vadd.f32 %v492, 0.0
    %496 = vset.pattern.permute.xlu0 0
    %497 = vperm.xlu0 %496, %v369
    %v498 = vpop.permute.xlu0 %497
    %501 = vset.pattern.permute.xlu0 0
    %502 = vperm.xlu0 %501, %v370
    %v503 = vpop.permute.xlu0 %502
    %v505 = vadd.f32 %v323, %v498
    %v506 = vadd.f32 %v326, %v503
    %v507 = vmul.f32 %v490, %v505
    %v508 = vmul.f32 %v492, %v506
    %v509 = vadd.f32 %v507, 0.0
    %v510 = vadd.f32 %v508, 0.0
    %v511 = vsub.f32 %v427, %v485
    %v512 = vsub.f32 %v428, %v486
    %v513 = vmul.f32 %v511, 1.442695
    %v514 = vpow.pop %v513
    %v515 = vmul.f32 %v512, 1.442695
    %v516 = vpow.pop %v515
    %v517 = vadd.f32 %v493, %v514
    %v518 = vadd.f32 %v494, %v516
    %520 = vset.pattern.permute.xlu0 0
    %521 = vperm.xlu0 %520, %v371
    %v522 = vpop.permute.xlu0 %521
    %525 = vset.pattern.permute.xlu0 0
    %526 = vperm.xlu0 %525, %v372
    %v527 = vpop.permute.xlu0 %526
    %v529 = vadd.f32 %v331, %v522
    %v530 = vadd.f32 %v334, %v527
    %v531 = vmul.f32 %v514, %v529
    %v532 = vmul.f32 %v516, %v530
    %v533 = vadd.f32 %v509, %v531
    %v534 = vadd.f32 %v510, %v532
    %v535 = vsub.f32 %v453, %v485
    %v536 = vsub.f32 %v454, %v486
    %v537 = vmul.f32 %v535, 1.442695
    %v538 = vpow.pop %v537
    %v539 = vmul.f32 %v536, 1.442695
    %v540 = vpow.pop %v539
    %v541 = vadd.f32 %v517, %v538
    %v542 = vadd.f32 %v518, %v540
    %544 = vset.pattern.permute.xlu0 0
    %545 = vperm.xlu0 %544, %v373
    %v546 = vpop.permute.xlu0 %545
    %549 = vset.pattern.permute.xlu0 0
    %550 = vperm.xlu0 %549, %v374
    %v551 = vpop.permute.xlu0 %550
    %v553 = vadd.f32 %v339, %v546
    %v554 = vadd.f32 %v342, %v551
    %v555 = vmul.f32 %v538, %v553
    %v556 = vmul.f32 %v540, %v554
    %v557 = vadd.f32 %v533, %v555
    %v558 = vadd.f32 %v534, %v556
    %v559 = vsub.f32 %v479, %v485
    %v560 = vsub.f32 %v480, %v486
    %v561 = vmul.f32 %v559, 1.442695
    %v562 = vpow.pop %v561
    %v563 = vmul.f32 %v560, 1.442695
    %v564 = vpow.pop %v563
    %v565 = vadd.f32 %v541, %v562
    %v566 = vadd.f32 %v542, %v564
    %568 = vset.pattern.permute.xlu0 0
    %569 = vperm.xlu0 %568, %v375
    %v570 = vpop.permute.xlu0 %569
    %573 = vset.pattern.permute.xlu0 0
    %574 = vperm.xlu0 %573, %v376
    %v575 = vpop.permute.xlu0 %574
    %v577 = vadd.f32 %v347, %v570
    %v578 = vadd.f32 %v350, %v575
    %v579 = vmul.f32 %v562, %v577
    %v580 = vmul.f32 %v564, %v578
    %v581 = vadd.f32 %v557, %v579
    %v582 = vadd.f32 %v558, %v580
    %v583 = vrcp.pop %v565
    %v584 = vrcp.pop %v566
    %v585 = vmul.f32 %v581, %v583
    %v586 = vmul.f32 %v582, %v584
    %v587 = vld [vmem:[%s5] sm:$0xf]
    %v588 = vld [vmem:[%s5 + $0x4] sm:$0xf]
    %v589 = vpack.c.bf16 %v586, %v585
    %v590 = vld [vmem:[%s6] sm:$0xff]
    %v591 = vld [vmem:[%s6 + $0x8] sm:$0xff]
    %593 = vset.pattern.permute.xlu0 0
    %594 = vperm.xlu0 %593, %v590
    %v595 = vpop.permute.xlu0 %594
    %598 = vset.pattern.permute.xlu0 0
    %599 = vperm.xlu0 %598, %v591
    %v600 = vpop.permute.xlu0 %599
    %v604 = vunpack.c.l.b16 %v587
    %v605 = vunpack.c.l.b16 %v588
    %v606 = vpack.c.b16 %v605, %v604
    %v608 = vsel %vm187, %v606, 0
    %610 = vmatprep.subr.bf16.mxu0 0
    %611 = vmatpush1.bf16.msra.mxu0 0
    %612 = vmatprep.subr.bf16.mxu0 0
    %613 = vmatpush1.bf16.msra.mxu0 0
    %614 = vmatprep.subr.bf16.mxu0 0
    %615 = vmatpush1.bf16.msra.mxu0 0
    %616 = vmatprep.subr.bf16.mxu0 0
    %617 = vmatpush1.bf16.msra.mxu0 0
    %618 = vmatprep.subr.bf16.mxu0 0
    %619 = vmatpush1.bf16.msra.mxu0 0
    %620 = vmatprep.subr.bf16.mxu0 0
    %621 = vmatpush1.bf16.msra.mxu0 0
    %622 = vmatprep.subr.bf16.mxu0 0
    %623 = vmatpush1.bf16.msra.mxu0 0
    %624 = vmatprep.subr.bf16.mxu0 0
    %625 = vmatpush1.bf16.msra.mxu0 %v589
    %626 = vmatprep.subr.bf16.mxu0 0
    %627 = vmatpush2.bf16.msra.mxu0 0
    %628 = vmatprep.subr.bf16.mxu0 0
    %629 = vmatpush2.bf16.msra.mxu0 0
    %630 = vmatprep.subr.bf16.mxu0 0
    %631 = vmatpush2.bf16.msra.mxu0 0
    %632 = vmatprep.subr.bf16.mxu0 0
    %633 = vmatpush2.bf16.msra.mxu0 0
    %634 = vmatprep.subr.bf16.mxu0 0
    %635 = vmatpush2.bf16.msra.mxu0 0
    %636 = vmatprep.subr.bf16.mxu0 0
    %637 = vmatpush2.bf16.msra.mxu0 0
    %638 = vmatprep.subr.bf16.mxu0 0
    %639 = vmatpush2.bf16.msra.mxu0 0
    %640 = vmatprep.subr.bf16.mxu0 0
    %641 = vmatpush2.bf16.msra.mxu0 0
    %642 = vmatprep.mubr.bf16.mxu0 0
    %643 = vmatmul.mubr.bf16.gmra.mxu0 %v608
    %v644 = vpop.f32.mrf.mxu0
    %v645 = vadd.f32 %v595, %v644
    %v646 = vpop.f32.mrf.mxu0
    %v647 = vpop.f32.mrf.mxu0
    %v648 = vadd.f32 %v600, %v647
    %v649 = vpop.f32.mrf.mxu0
    %650 = vdwg.mxu0
    %v651 = vadd.f32 %v46, %v645
    %v652 = vadd.f32 %v47, %v648
    %v653 = vld [vmem:[%s7] sm:$0xff]
    %v654 = vld [vmem:[%s7 + $0x8] sm:$0xff]
    %v655 = vld [vmem:[%s8] sm:$0xff]
    %v656 = vld [vmem:[%s8 + $0x8] sm:$0xff]
    %v657 = vadd.f32 %v651, %v652
    %v658 = vrot.slane %v657, 4
    %v659 = vadd.f32 %v657, %v658
    %v660 = vrot.slane %v659, 2
    %v661 = vadd.f32 %v659, %v660
    %v662 = vrot.slane %v661, 1
    %v663 = vadd.f32 %v661, %v662
    %v664 = vmul.f32 %v651, %v651
    %v665 = vmul.f32 %v652, %v652
    %v666 = vadd.f32 %v664, %v665
    %v667 = vrot.slane %v666, 4
    %v668 = vadd.f32 %v666, %v667
    %v669 = vrot.slane %v668, 2
    %v670 = vadd.f32 %v668, %v669
    %v671 = vrot.slane %v670, 1
    %v672 = vadd.f32 %v670, %v671
    %v673 = vmul.f32 %v663, 0.0625
    %v674 = vmul.f32 %v672, 0.0625
    %v675 = vmul.f32 %v673, %v673
    %v676 = vsub.f32 %v674, %v675
    %v677 = vsub.f32 %v651, %v673
    %v678 = vsub.f32 %v652, %v673
    %v679 = vadd.f32 %v676, 1e-05
    %v680 = vrsqrt.pop %v679
    %v681 = vmul.f32 %v677, %v680
    %v682 = vmul.f32 %v678, %v680
    %684 = vset.pattern.permute.xlu0 0
    %685 = vperm.xlu0 %684, %v653
    %v686 = vpop.permute.xlu0 %685
    %689 = vset.pattern.permute.xlu0 0
    %690 = vperm.xlu0 %689, %v654
    %v691 = vpop.permute.xlu0 %690
    %v693 = vmul.f32 %v681, %v686
    %v694 = vmul.f32 %v682, %v691
    %696 = vset.pattern.permute.xlu0 0
    %697 = vperm.xlu0 %696, %v655
    %v698 = vpop.permute.xlu0 %697
    %701 = vset.pattern.permute.xlu0 0
    %702 = vperm.xlu0 %701, %v656
    %v703 = vpop.permute.xlu0 %702
    %v705 = vadd.f32 %v693, %v698
    %v706 = vadd.f32 %v694, %v703
    %v707 = vld [vmem:[%s9] sm:$0xf]
    %v708 = vld [vmem:[%s9 + $0x4] sm:$0xf]
    %v709 = vld [vmem:[%s9 + $0x8] sm:$0xf]
    %v710 = vld [vmem:[%s9 + $0xc] sm:$0xf]
    %v711 = vld [vmem:[%s9 + $0x10] sm:$0xf]
    %v712 = vld [vmem:[%s9 + $0x14] sm:$0xf]
    %v713 = vld [vmem:[%s9 + $0x18] sm:$0xf]
    %v714 = vld [vmem:[%s9 + $0x1c] sm:$0xf]
    %v715 = vpack.c.bf16 %v706, %v705
    %v716 = vld [vmem:[%s10] sm:$0xff]
    %v717 = vld [vmem:[%s10 + $0x8] sm:$0xff]
    %v718 = vld [vmem:[%s10 + $0x10] sm:$0xff]
    %v719 = vld [vmem:[%s10 + $0x18] sm:$0xff]
    %v720 = vld [vmem:[%s10 + $0x20] sm:$0xff]
    %v721 = vld [vmem:[%s10 + $0x28] sm:$0xff]
    %v722 = vld [vmem:[%s10 + $0x30] sm:$0xff]
    %v723 = vld [vmem:[%s10 + $0x38] sm:$0xff]
    %725 = vset.pattern.permute.xlu0 0
    %726 = vperm.xlu0 %725, %v716
    %v727 = vpop.permute.xlu0 %726
    %730 = vset.pattern.permute.xlu0 0
    %731 = vperm.xlu0 %730, %v717
    %v732 = vpop.permute.xlu0 %731
    %735 = vset.pattern.permute.xlu0 0
    %736 = vperm.xlu0 %735, %v718
    %v737 = vpop.permute.xlu0 %736
    %740 = vset.pattern.permute.xlu0 0
    %741 = vperm.xlu0 %740, %v719
    %v742 = vpop.permute.xlu0 %741
    %745 = vset.pattern.permute.xlu0 0
    %746 = vperm.xlu0 %745, %v720
    %v747 = vpop.permute.xlu0 %746
    %750 = vset.pattern.permute.xlu0 0
    %751 = vperm.xlu0 %750, %v721
    %v752 = vpop.permute.xlu0 %751
    %755 = vset.pattern.permute.xlu0 0
    %756 = vperm.xlu0 %755, %v722
    %v757 = vpop.permute.xlu0 %756
    %760 = vset.pattern.permute.xlu0 0
    %761 = vperm.xlu0 %760, %v723
    %v762 = vpop.permute.xlu0 %761
    %v772 = vunpack.c.l.b16 %v707
    %v773 = vunpack.c.l.b16 %v708
    %v774 = vunpack.c.l.b16 %v709
    %v775 = vunpack.c.l.b16 %v710
    %v776 = vunpack.c.l.b16 %v711
    %v777 = vunpack.c.l.b16 %v712
    %v778 = vunpack.c.l.b16 %v713
    %v779 = vunpack.c.l.b16 %v714
    %v780 = vpack.c.b16 %v773, %v772
    %v781 = vpack.c.b16 %v775, %v774
    %v782 = vpack.c.b16 %v777, %v776
    %v783 = vpack.c.b16 %v779, %v778
    %v785 = vsel %vm187, %v780, 0
    %v788 = vsel %vm187, %v781, 0
    %v791 = vsel %vm187, %v782, 0
    %v794 = vsel %vm187, %v783, 0
    %796 = vmatprep.subr.bf16.mxu0 0
    %797 = vmatpush1.bf16.msra.mxu0 0
    %798 = vmatprep.subr.bf16.mxu0 0
    %799 = vmatpush1.bf16.msra.mxu0 0
    %800 = vmatprep.subr.bf16.mxu0 0
    %801 = vmatpush1.bf16.msra.mxu0 0
    %802 = vmatprep.subr.bf16.mxu0 0
    %803 = vmatpush1.bf16.msra.mxu0 0
    %804 = vmatprep.subr.bf16.mxu0 0
    %805 = vmatpush1.bf16.msra.mxu0 0
    %806 = vmatprep.subr.bf16.mxu0 0
    %807 = vmatpush1.bf16.msra.mxu0 0
    %808 = vmatprep.subr.bf16.mxu0 0
    %809 = vmatpush1.bf16.msra.mxu0 0
    %810 = vmatprep.subr.bf16.mxu0 0
    %811 = vmatpush1.bf16.msra.mxu0 %v715
    %812 = vmatprep.subr.bf16.mxu0 0
    %813 = vmatpush2.bf16.msra.mxu0 0
    %814 = vmatprep.subr.bf16.mxu0 0
    %815 = vmatpush2.bf16.msra.mxu0 0
    %816 = vmatprep.subr.bf16.mxu0 0
    %817 = vmatpush2.bf16.msra.mxu0 0
    %818 = vmatprep.subr.bf16.mxu0 0
    %819 = vmatpush2.bf16.msra.mxu0 0
    %820 = vmatprep.subr.bf16.mxu0 0
    %821 = vmatpush2.bf16.msra.mxu0 0
    %822 = vmatprep.subr.bf16.mxu0 0
    %823 = vmatpush2.bf16.msra.mxu0 0
    %824 = vmatprep.subr.bf16.mxu0 0
    %825 = vmatpush2.bf16.msra.mxu0 0
    %826 = vmatprep.subr.bf16.mxu0 0
    %827 = vmatpush2.bf16.msra.mxu0 0
    %828 = vmatprep.mubr.bf16.mxu0 0
    %829 = vmatmul.mubr.bf16.gmra.mxu0 %v785
    %v830 = vpop.f32.mrf.mxu0
    %v831 = vadd.f32 %v727, %v830
    %v832 = vpop.f32.mrf.mxu0
    %v833 = vpop.f32.mrf.mxu0
    %v834 = vadd.f32 %v732, %v833
    %v835 = vpop.f32.mrf.mxu0
    %836 = vmatprep.mubr.bf16.mxu0 0
    %837 = vmatmul.mubr.bf16.gmra.mxu0 %v788
    %v838 = vpop.f32.mrf.mxu0
    %v839 = vadd.f32 %v737, %v838
    %v840 = vpop.f32.mrf.mxu0
    %v841 = vpop.f32.mrf.mxu0
    %v842 = vadd.f32 %v742, %v841
    %v843 = vpop.f32.mrf.mxu0
    %844 = vmatprep.mubr.bf16.mxu0 0
    %845 = vmatmul.mubr.bf16.gmra.mxu0 %v791
    %v846 = vpop.f32.mrf.mxu0
    %v847 = vadd.f32 %v747, %v846
    %v848 = vpop.f32.mrf.mxu0
    %v849 = vpop.f32.mrf.mxu0
    %v850 = vadd.f32 %v752, %v849
    %v851 = vpop.f32.mrf.mxu0
    %852 = vmatprep.mubr.bf16.mxu0 0
    %853 = vmatmul.mubr.bf16.gmra.mxu0 %v794
    %v854 = vpop.f32.mrf.mxu0
    %v855 = vadd.f32 %v757, %v854
    %v856 = vpop.f32.mrf.mxu0
    %v857 = vpop.f32.mrf.mxu0
    %v858 = vadd.f32 %v762, %v857
    %v859 = vpop.f32.mrf.mxu0
    %860 = vdwg.mxu0
    %v861 = vmul.f32 %v831, 0.5
    %v862 = vmul.f32 %v834, 0.5
    %v863 = vmul.f32 %v839, 0.5
    %v864 = vmul.f32 %v842, 0.5
    %v865 = vmul.f32 %v847, 0.5
    %v866 = vmul.f32 %v850, 0.5
    %v867 = vmul.f32 %v855, 0.5
    %v868 = vmul.f32 %v858, 0.5
    %v869 = vmul.f32 %v831, 0.70710677
    %v870 = vmul.f32 %v834, 0.70710677
    %v871 = vmul.f32 %v839, 0.70710677
    %v872 = vmul.f32 %v842, 0.70710677
    %v873 = vmul.f32 %v847, 0.70710677
    %v874 = vmul.f32 %v850, 0.70710677
    %v875 = vmul.f32 %v855, 0.70710677
    %v876 = vmul.f32 %v858, 0.70710677
    %v877 = verf.f32.pop %v869
    %v878 = verf.f32.pop %v870
    %v879 = verf.f32.pop %v871
    %v880 = verf.f32.pop %v872
    %v881 = verf.f32.pop %v873
    %v882 = verf.f32.pop %v874
    %v883 = verf.f32.pop %v875
    %v884 = verf.f32.pop %v876
    %v885 = vadd.f32 %v877, 1.0
    %v886 = vadd.f32 %v878, 1.0
    %v887 = vadd.f32 %v879, 1.0
    %v888 = vadd.f32 %v880, 1.0
    %v889 = vadd.f32 %v881, 1.0
    %v890 = vadd.f32 %v882, 1.0
    %v891 = vadd.f32 %v883, 1.0
    %v892 = vadd.f32 %v884, 1.0
    %v893 = vmul.f32 %v861, %v885
    %v894 = vmul.f32 %v862, %v886
    %v895 = vmul.f32 %v863, %v887
    %v896 = vmul.f32 %v864, %v888
    %v897 = vmul.f32 %v865, %v889
    %v898 = vmul.f32 %v866, %v890
    %v899 = vmul.f32 %v867, %v891
    %v900 = vmul.f32 %v868, %v892
    %v901 = vld [vmem:[%s11] sm:$0xf]
    %v902 = vld [vmem:[%s11 + $0x4] sm:$0xf]
    %v903 = vpack.c.bf16 %v894, %v893
    %v904 = vpack.c.bf16 %v896, %v895
    %v905 = vpack.c.bf16 %v898, %v897
    %v906 = vpack.c.bf16 %v900, %v899
    %v907 = vld [vmem:[%s12] sm:$0xff]
    %v908 = vld [vmem:[%s12 + $0x8] sm:$0xff]
    %910 = vset.pattern.permute.xlu0 0
    %911 = vperm.xlu0 %910, %v907
    %v912 = vpop.permute.xlu0 %911
    %915 = vset.pattern.permute.xlu0 0
    %916 = vperm.xlu0 %915, %v908
    %v917 = vpop.permute.xlu0 %916
    %v921 = vunpack.c.l.b16 %v901
    %v922 = vunpack.c.l.b16 %v902
    %v923 = vpack.c.b16 %v922, %v921
    %vm924 = vcmask 523264
    %v926 = vsel %vm924, %v923, 0
    %928 = vmatprep.subr.bf16.mxu0 0
    %929 = vmatpush1.bf16.msra.mxu0 0
    %930 = vmatprep.subr.bf16.mxu0 0
    %931 = vmatpush1.bf16.msra.mxu0 0
    %932 = vmatprep.subr.bf16.mxu0 0
    %933 = vmatpush1.bf16.msra.mxu0 0
    %934 = vmatprep.subr.bf16.mxu0 0
    %935 = vmatpush1.bf16.msra.mxu0 0
    %936 = vmatprep.subr.bf16.mxu0 0
    %937 = vmatpush1.bf16.msra.mxu0 %v906
    %938 = vmatprep.subr.bf16.mxu0 0
    %939 = vmatpush1.bf16.msra.mxu0 %v905
    %940 = vmatprep.subr.bf16.mxu0 0
    %941 = vmatpush1.bf16.msra.mxu0 %v904
    %942 = vmatprep.subr.bf16.mxu0 0
    %943 = vmatpush1.bf16.msra.mxu0 %v903
    %944 = vmatprep.subr.bf16.mxu0 0
    %945 = vmatpush2.bf16.msra.mxu0 0
    %946 = vmatprep.subr.bf16.mxu0 0
    %947 = vmatpush2.bf16.msra.mxu0 0
    %948 = vmatprep.subr.bf16.mxu0 0
    %949 = vmatpush2.bf16.msra.mxu0 0
    %950 = vmatprep.subr.bf16.mxu0 0
    %951 = vmatpush2.bf16.msra.mxu0 0
    %952 = vmatprep.subr.bf16.mxu0 0
    %953 = vmatpush2.bf16.msra.mxu0 0
    %954 = vmatprep.subr.bf16.mxu0 0
    %955 = vmatpush2.bf16.msra.mxu0 0
    %956 = vmatprep.subr.bf16.mxu0 0
    %957 = vmatpush2.bf16.msra.mxu0 0
    %958 = vmatprep.subr.bf16.mxu0 0
    %959 = vmatpush2.bf16.msra.mxu0 0
    %960 = vmatprep.mubr.bf16.mxu0 0
    %961 = vmatmul.mubr.bf16.gmra.mxu0 %v926
    %v962 = vpop.f32.mrf.mxu0
    %v963 = vadd.f32 %v912, %v962
    %v964 = vpop.f32.mrf.mxu0
    %v965 = vpop.f32.mrf.mxu0
    %v966 = vadd.f32 %v917, %v965
    %v967 = vpop.f32.mrf.mxu0
    %968 = vdwg.mxu0
    %v969 = vadd.f32 %v651, %v963
    %v970 = vadd.f32 %v652, %v966
    %971 = vst [vmem:[#allocation2] sm:$0xff] %v969
    %972 = vst [vmem:[#allocation2 + $0x8] sm:$0xff] %v970
    // Predicated region
    $region54: #{tpu_custom_call.1} parent=1 // pred_check
      _
    $region55: #{tpu_custom_call.1} parent=1 // pred_check_branch
      %974 = sbr.rel (0) target = $region57
    $region56: #{tpu_custom_call.1} parent=1 // pred_region
      %s976 = ssub.s32 256, 256
      %977 = vsyncadd [#allocation3], %s976
      %s978 = sshll.u32 [#allocation2], 4
      %s979 = int_to_ptr.vmem [resolvable:$true] %s978
      %984 = dma.vmem_to_hbm [thread:$0]  %s979, 256, %s13, [#allocation3], 128, 128, 8
    $region57: #{tpu_custom_call.1} parent=1 // pred_fallthru
      _
    // Predicated region
    $region58: #{tpu_custom_call.1} parent=1 // pred_check
      _
    $region59: #{tpu_custom_call.1} parent=1 // pred_check_branch
      %986 = sbr.rel (0) target = $region61
    $region60: #{tpu_custom_call.1} parent=1 // pred_region
      %987 = dma.done [#allocation3], 256
    $region61: #{tpu_custom_call.1} parent=1 // pred_fallthru
      _
    %988 = vsyncpa [#allocation3], 1

</llo_original>
